<compile_context>
chip_gen: v7x
topology: tpu7x:2x2x1
jax: 0.10.0
libtpu: 0.0.40
codegen_flags: <defaults>
</compile_context>

<pallas_src>
import jax
import jax.numpy as jnp
from jax.experimental import pallas as pl
from jax.experimental.pallas import tpu as pltpu


def _round_up(n, m):
    return ((n + m - 1) // m) * m


def _device_kind():
    try:
        return jax.devices()[0].device_kind.lower()
    except Exception:
        return ""


def _vmem_capacity_bytes():
    # Prefer the trace-time query; fall back to device_kind so a missing
    # get_tpu_info() never yields a > physical limit on v7x (64 MiB / TC).
    try:
        cap = getattr(pltpu.get_tpu_info(), "vmem_capacity_bytes", None)
        if cap:
            return int(cap)
    except Exception:
        pass
    if "v7" in _device_kind():
        return 64 * 1024 * 1024
    return 128 * 1024 * 1024


def _vmem_limit_bytes():
    return int(_vmem_capacity_bytes() * 3 // 4)   # ~25% headroom


def mlp_kernel(x_ref, w1_ref, w2_ref, o_ref, acc_ref):
    """One (row-tile, H-tile) grid step of out = relu(x @ w1)^2 @ w2.

    x_ref: (tm, Dp) bf16 (resident across the H axis), w1_ref: (Dp, th) bf16,
    w2_ref: (th, Dp) bf16, o_ref: (tm, Dp), acc_ref: (tm, Dp) f32 scratch.
    """
    @pl.when(pl.program_id(1) == 0)
    def _():
        acc_ref[...] = jnp.zeros_like(acc_ref)

    # First matmul chunk -> f32, relu^2, cast back to bf16 for the 2nd MXU
    # pass (per-chunk intermediate only: (tm, th)).
    h = jnp.dot(x_ref[...], w1_ref[...], preferred_element_type=jnp.float32)
    h = jnp.maximum(h, 0.0)
    h = (h * h).astype(w2_ref.dtype)
    acc_ref[...] += jnp.dot(h, w2_ref[...], preferred_element_type=jnp.float32)

    @pl.when(pl.program_id(1) == pl.num_programs(1) - 1)
    def _():
        o_ref[...] = acc_ref[...].astype(o_ref.dtype)


def prepare_mlp_weights(w_fc, w_proj, *, compute_dtype=jnp.bfloat16):
    """Transpose + zero-pad + cast the PyTorch-layout MLP weights ONCE.

    w_fc:   (H, D) == c_fc.weight      w_proj: (D, H) == c_proj.weight
    Returns (w1, w2) with shapes (Dp, Hp) / (Hp, Dp) in compute_dtype.
    Call at parameter-init time, NOT per forward call (hoists the transpose /
    pad / cast HBM traffic out of the hot path).
    Zero padding is numerically exact: padded hidden columns give h == 0 and
    relu(0)^2 == 0; padded output columns are sliced away by the wrapper.
    """
    H, D = w_fc.shape
    assert w_proj.shape == (D, H)
    Dp = _round_up(D, 128)
    Hp = _round_up(H, 128)
    # Prefer a 256-aligned hidden width (v6e/v7x MXU is 2x256^2) when the
    # extra padding is small relative to H.
    if Hp % 256 != 0 and Hp >= 1024:
        Hp = _round_up(H, 256)
    w1 = jnp.zeros((Dp, Hp), compute_dtype).at[:D, :H].set(
        w_fc.T.astype(compute_dtype))
    w2 = jnp.zeros((Hp, Dp), compute_dtype).at[:H, :D].set(
        w_proj.T.astype(compute_dtype))
    return w1, w2


def _vmem_estimate_bytes(tm, Dp, th, out_itemsize):
    x_b = 2 * tm * Dp * 2                  # double-buffered bf16 x tile
    w_b = 2 * (Dp * th + th * Dp) * 2      # double-buffered bf16 w1/w2 tiles
    o_b = 2 * tm * Dp * out_itemsize       # double-buffered output tile
    acc = tm * Dp * 4                      # f32 accumulator scratch
    return x_b + w_b + o_b + acc


def _halve_rows(t):
    return max(8, (t // 2) // 8 * 8)


def mlp_pallas(x, w1, w2, *, tm=None, th=None, out_dtype=None):
    """RWKV7 MLP forward: relu(x @ w1)^2 @ w2 with prepared/padded weights.

    x:  (B, T, D)
    w1: (Dp, Hp) bf16 from prepare_mlp_weights
    w2: (Hp, Dp) bf16 from prepare_mlp_weights
    Returns (B, T, D); defaults to bf16 output (half the store bytes) — pass
    out_dtype=x.dtype if a wider dtype is required downstream.
    """
    B, T, D = x.shape
    M = B * T
    Dp, Hp = w1.shape
    assert w2.shape == (Hp, Dp)
    compute_dtype = w1.dtype
    if out_dtype is None:
        out_dtype = compute_dtype

    # H tile: largest of 512/256/128 that divides the padded hidden width.
    if th is None:
        th = 128
        for cand in (512, 256):
            if Hp % cand == 0:
                th = cand
                break

    kind = _device_kind()
    if tm is None:
        # v5e: keep 256 (smaller headroom, 128-wide MXU already full width).
        # v6e/v7x: 512 amortizes per-step overhead now that the live
        # intermediate is only (tm, th).
        tm = 256 if "v5" in kind else 512

    tm_eff = min(tm, _round_up(M, 8))

    # Keep the per-step working set inside the chip's VMEM budget: shrink the
    # row tile first, then the H tile.
    budget = int(_vmem_limit_bytes() * 0.9)
    out_sz = jnp.dtype(out_dtype).itemsize
    while _vmem_estimate_bytes(tm_eff, Dp, th, out_sz) > budget and tm_eff > 64:
        tm_eff = _halve_rows(tm_eff)
    while _vmem_estimate_bytes(tm_eff, Dp, th, out_sz) > budget and th > 128:
        th //= 2
    while _vmem_estimate_bytes(tm_eff, Dp, th, out_sz) > budget and tm_eff > 8:
        tm_eff = _halve_rows(tm_eff)

    # Megacore / 2-TC v7x: make sure the parallel row axis has >= 2 steps on
    # small-M calls so both TensorCores get work.
    if M > 8 and _round_up(M, tm_eff) // tm_eff < 2:
        tm_eff = max(8, _round_up((M + 1) // 2, 8))

    Mp = _round_up(M, tm_eff)
    n_rows = Mp // tm_eff
    n_h = Hp // th

    # Lane-dense activations; skip the extra pad copy when shapes line up.
    x2 = x.reshape(M, D).astype(compute_dtype)
    if (Mp, Dp) != (M, D):
        x2 = jnp.zeros((Mp, Dp), compute_dtype).at[:M, :D].set(x2)

    out = pl.pallas_call(
        mlp_kernel,
        out_shape=jax.ShapeDtypeStruct((Mp, Dp), out_dtype),
        grid_spec=pltpu.PrefetchScalarGridSpec(
            num_scalar_prefetch=0,
            grid=(n_rows, n_h),
            in_specs=[
                # x row tile: constant over the H axis -> fetched once/row.
                pl.BlockSpec((tm_eff, Dp), lambda i, h: (i, 0)),
                # streamed (double-buffered) weight tiles along the H axis.
                pl.BlockSpec((Dp, th), lambda i, h: (0, h)),
                pl.BlockSpec((th, Dp), lambda i, h: (h, 0)),
            ],
            out_specs=pl.BlockSpec((tm_eff, Dp), lambda i, h: (i, 0)),
            scratch_shapes=[pltpu.VMEM((tm_eff, Dp), jnp.float32)],
        ),
        compiler_params=pltpu.CompilerParams(
            dimension_semantics=("parallel", "arbitrary"),
            vmem_limit_bytes=_vmem_limit_bytes(),
        ),
    )(x2, w1, w2)

    if (Mp, Dp) != (M, D):
        out = out[:M, :D]
    return out.reshape(B, T, D)


if __name__ == "__main__":
    key = jax.random.PRNGKey(0)

    def reference(x, w_fc, w_proj):
        # Same bf16-matmul-input / f32-accumulation numerics as the kernel.
        xb = x.astype(jnp.bfloat16)
        h = jnp.dot(xb, w_fc.T.astype(jnp.bfloat16),
                    preferred_element_type=jnp.float32)
        h = jnp.maximum(h, 0.0) ** 2
        return jnp.dot(h.astype(jnp.bfloat16), w_proj.T.astype(jnp.bfloat16),
                       preferred_element_type=jnp.float32)

    def run_case(case_key, B, T, D):
        H = 7 * D // 2
        kx, kfc, kproj = jax.random.split(case_key, 3)
        x = jax.random.normal(kx, (B, T, D), dtype=jnp.float32)
        # NOTE: the PyTorch __init__ zero-inits c_proj.weight; small random
        # values are used here so the second matmul is actually exercised.
        w_fc = jax.random.normal(kfc, (H, D), dtype=jnp.float32) * 0.02
        w_proj = jax.random.normal(kproj, (D, H), dtype=jnp.float32) * 0.02

        w1, w2 = prepare_mlp_weights(w_fc, w_proj)   # hoisted: once per params
        out = mlp_pallas(x, w1, w2)
        out = jax.block_until_ready(out)
        assert out.shape == (B, T, D)

        ref = reference(x, w_fc, w_proj)
        assert jnp.allclose(out.astype(jnp.float32), ref,
                            atol=5e-3, rtol=5e-2), \
            f"mismatch vs reference for (B,T,D)=({B},{T},{D})"

    k0, k1 = jax.random.split(key)
    # Small config consistent with the module: n_embd=32 -> hidden=112.
    run_case(k0, B=2, T=8, D=32)
    # Exercises the H-reduction grid axis (Hp=1792 -> 7 x 256-wide H tiles)
    # and the multi-row-tile (megacore-split) path.
    run_case(k1, B=1, T=32, D=512)

    print("KERNEL_OK")
</pallas_src>

<mosaic_0001>
module attributes {stable_mosaic.version = 11 : i64} {
  func.func @mlp_kernel(%arg0: i32, %arg1: i32, %arg2: memref<8x128xbf16, #tpu.memory_space<vmem>>, %arg3: memref<128x128xbf16, #tpu.memory_space<vmem>>, %arg4: memref<128x128xbf16, #tpu.memory_space<vmem>>, %arg5: memref<8x128xbf16, #tpu.memory_space<vmem>>, %arg6: memref<8x128xf32, #tpu.memory_space<vmem>>) attributes {dimension_semantics = [#tpu.dimension_semantics<parallel>, #tpu.dimension_semantics<arbitrary>], iteration_bounds = array<i64: 2, 1>, scalar_prefetch = 0 : i64, scratch_operands = 1 : i64, tpu.core_type = #tpu.core_type<tc>, window_params = [{transform_indices = @transform_0, window_bounds = array<i64: 8, 128>}, {transform_indices = @transform_1, window_bounds = array<i64: 128, 128>}, {transform_indices = @transform_2, window_bounds = array<i64: 128, 128>}, {transform_indices = @transform_3, window_bounds = array<i64: 8, 128>}]} {
    %c0_i32 = arith.constant 0 : i32
    %0 = arith.cmpi eq, %arg1, %c0_i32 : i32
    %1 = arith.extui %0 : i1 to i32
    %c0_i32_0 = arith.constant 0 : i32
    %2 = arith.cmpi ne, %1, %c0_i32_0 : i32
    scf.if %2 {
      %cst_14 = arith.constant 0.000000e+00 : f32
      %18 = vector.broadcast %cst_14 : f32 to vector<8x128xf32>
      %c0_15 = arith.constant 0 : index
      %c0_16 = arith.constant 0 : index
      %19 = vector.load %arg6[%c0_15, %c0_16] : memref<8x128xf32, #tpu.memory_space<vmem>>, vector<8x128xf32>
      tpu.vector_store %arg6[%c0_15, %c0_16], %18 {strides = array<i32>} : memref<8x128xf32, #tpu.memory_space<vmem>>, vector<8x128xf32>,
    } else {
    }
    %c0 = arith.constant 0 : index
    %c0_1 = arith.constant 0 : index
    %3 = vector.load %arg2[%c0, %c0_1] : memref<8x128xbf16, #tpu.memory_space<vmem>>, vector<8x128xbf16>
    %c0_2 = arith.constant 0 : index
    %c0_3 = arith.constant 0 : index
    %4 = vector.load %arg3[%c0_2, %c0_3] : memref<128x128xbf16, #tpu.memory_space<vmem>>, vector<128x128xbf16>
    %cst = arith.constant dense<0.000000e+00> : vector<8x128xf32>
    %5 = tpu.matmul %3, %4, %cst {dimension_numbers = #tpu.dot_dimension_numbers<[1], [0], [0], [1], [0, 0, 1, 1], [], []>} : vector<8x128xbf16>, vector<128x128xbf16>, vector<8x128xf32> -> vector<8x128xf32>
    %cst_4 = arith.constant 0.000000e+00 : f32
    %6 = vector.broadcast %cst_4 : f32 to vector<8x128xf32>
    %7 = arith.maximumf %5, %6 : vector<8x128xf32>
    %8 = arith.mulf %7, %7 : vector<8x128xf32>
    %9 = arith.truncf %8 : vector<8x128xf32> to vector<8x128xbf16>
    %c0_5 = arith.constant 0 : index
    %c0_6 = arith.constant 0 : index
    %10 = vector.load %arg6[%c0_5, %c0_6] : memref<8x128xf32, #tpu.memory_space<vmem>>, vector<8x128xf32>
    %c0_7 = arith.constant 0 : index
    %c0_8 = arith.constant 0 : index
    %11 = vector.load %arg4[%c0_7, %c0_8] : memref<128x128xbf16, #tpu.memory_space<vmem>>, vector<128x128xbf16>
    %cst_9 = arith.constant dense<0.000000e+00> : vector<8x128xf32>
    %12 = tpu.matmul %9, %11, %cst_9 {dimension_numbers = #tpu.dot_dimension_numbers<[1], [0], [0], [1], [0, 0, 1, 1], [], []>} : vector<8x128xbf16>, vector<128x128xbf16>, vector<8x128xf32> -> vector<8x128xf32>
    %13 = arith.addf %10, %12 : vector<8x128xf32>
    %c0_10 = arith.constant 0 : index
    %c0_11 = arith.constant 0 : index
    %14 = vector.load %arg6[%c0_10, %c0_11] : memref<8x128xf32, #tpu.memory_space<vmem>>, vector<8x128xf32>
    tpu.vector_store %arg6[%c0_10, %c0_11], %13 {strides = array<i32>} : memref<8x128xf32, #tpu.memory_space<vmem>>, vector<8x128xf32>,
    %c0_i32_12 = arith.constant 0 : i32
    %15 = arith.cmpi eq, %arg1, %c0_i32_12 : i32
    %16 = arith.extui %15 : i1 to i32
    %c0_i32_13 = arith.constant 0 : i32
    %17 = arith.cmpi ne, %16, %c0_i32_13 : i32
    scf.if %17 {
      %c0_14 = arith.constant 0 : index
      %c0_15 = arith.constant 0 : index
      %18 = vector.load %arg6[%c0_14, %c0_15] : memref<8x128xf32, #tpu.memory_space<vmem>>, vector<8x128xf32>
      %19 = arith.truncf %18 : vector<8x128xf32> to vector<8x128xbf16>
      %c0_16 = arith.constant 0 : index
      %c0_17 = arith.constant 0 : index
      %20 = vector.load %arg5[%c0_16, %c0_17] : memref<8x128xbf16, #tpu.memory_space<vmem>>, vector<8x128xbf16>
      tpu.vector_store %arg5[%c0_16, %c0_17], %19 {strides = array<i32>} : memref<8x128xbf16, #tpu.memory_space<vmem>>, vector<8x128xbf16>,
    } else {
    }
    return
  }
  func.func @transform_0(%arg0: i32, %arg1: i32) -> (i32, i32) {
    %c0_i32 = arith.constant 0 : i32
    %c0_i32_0 = arith.constant 0 : i32
    return %arg0, %c0_i32 : i32, i32
  }
  func.func @transform_1(%arg0: i32, %arg1: i32) -> (i32, i32) {
    %c0_i32 = arith.constant 0 : i32
    %c0_i32_0 = arith.constant 0 : i32
    return %c0_i32, %arg1 : i32, i32
  }
  func.func @transform_2(%arg0: i32, %arg1: i32) -> (i32, i32) {
    %c0_i32 = arith.constant 0 : i32
    %c0_i32_0 = arith.constant 0 : i32
    return %arg1, %c0_i32 : i32, i32
  }
  func.func @transform_3(%arg0: i32, %arg1: i32) -> (i32, i32) {
    %c0_i32 = arith.constant 0 : i32
    %c0_i32_0 = arith.constant 0 : i32
    return %arg0, %c0_i32 : i32, i32
  }
}

</mosaic_0001>

<llo_original>
// kernel: tpu_custom_call.1
$region0: #{tpu_custom_call.1}
  #allocation0 [shape = 'u32[]', space=smem, size = 0x4, offset = 0x4, fixed_abs, tag = 'smem constant byte address 0x4 - core index']
  #allocation1 [shape = 'u32[144,128]{1,0:T(1,128)}', space=vmem, size = 0x12000, scoped, tag = 'internal scratch']
  #allocation2 [shape = 'f32[8,128]{1,0:T(8,128)}', space=vmem, size = 0x1000, scoped, tag = 'scratch operand']
  %s0 = inlined_call_operand.hbm [shape: bf16[16,128], index: 0, kind: input, shape index: {}]
  %s1 = inlined_call_operand.hbm [shape: bf16[128,128], index: 1, kind: input, shape index: {}]
  %s2 = inlined_call_operand.hbm [shape: bf16[128,128], index: 2, kind: input, shape index: {}]
  %s3 = inlined_call_operand.hbm [shape: bf16[16,128], index: 3, kind: output, shape index: {}]
  %s4 = sld [smem:[#allocation0]]
  $region65: #{tpu_custom_call.1} parent=0
    _
  %s6 = ssub.s32 1, %s4
  %s7 = scalar_select 0, %s6, %s4
  $region1: #{tpu_custom_call.1} parent=0
    #allocation3 [shape = 'u8[4096]{0}', space=vmem, size = 0x1000, scoped, tag = 'input window, operand 0']
    #allocation4 [shape = 's32[2]{0}', space=sflag, size = 0x8, scoped, tag = 'scoped memory for tpu_custom_call.1']
    #allocation5 [shape = 's32[2]{0}', space=sflag, size = 0x8, scoped, tag = 'scoped memory for tpu_custom_call.1']
    #allocation6 [shape = 'u8[32768]{0}', space=vmem, size = 0x8000, scoped, tag = 'input window, operand 1, single buffered']
    #allocation7 [shape = 's32[1]{0}', space=sflag, size = 0x4, scoped, tag = 'scoped memory for tpu_custom_call.1']
    #allocation8 [shape = 'u8[32768]{0}', space=vmem, size = 0x8000, scoped, tag = 'input window, operand 2, single buffered']
    #allocation9 [shape = 'u8[4096]{0}', space=vmem, size = 0x1000, scoped, tag = 'output window, operand 0']
    %8 = vsyncpa [#allocation4], 0
    %s9 = scalar_lea.sflag [#allocation4], 1
    %10 = vsyncpa %s9, 0
    %11 = vsyncpa [#allocation7], 0
    %12 = vsyncpa [#allocation5], 0
    %s13 = scalar_lea.sflag [#allocation5], 1
    %14 = vsyncpa %s13, 0
    loop: start=0, step=1, limit=4
    $region2: #{tpu_custom_call.1} parent=1 // loop_pre_header
      _
    $region3: #{tpu_custom_call.1} parent=1 // loop_header
      %s16 = sphi 0, %s20
      %p17 = scmp.ge.s32.totalorder %s16, 4
      %s23 = sphi 0, %s35
      %s24 = sphi 0, %s31
      %s25 = sphi 0, %s23
      %s26 = sphi 0, %s24
      %s27 = sphi 0, %s25
      %s28 = sphi 0, %s26
      %s38 = sphi 0, %s40
      %s41 = sphi 0, %s38
      %s42 = sphi 0, %s41
      %s58 = sphi 0, %s42
      %s64 = sphi 0, %s66
      %s67 = sphi 0, %s64
      %s68 = sphi 0, %s67
      %s84 = sphi 0, %s68
      %s90 = sphi 0, %s92
      %s93 = sphi 0, %s90
      %s94 = sphi 0, %s93
      %s110 = sphi 0, %s94
      %s116 = sphi 0, %s118
      %s119 = sphi 0, %s116
      %s120 = sphi 0, %s119
      %s136 = sphi 0, %s120
    $region4: #{tpu_custom_call.1} parent=1 // loop_header_branch
      %19 = sbr.rel (%p17) target = $region8
    $region5: #{tpu_custom_call.1} parent=1 // loop_body
      %s21 = ssub.s32 %s16, 1
      %s22 = ssub.s32 %s16, 2
      %s29 = sadd.s32 1, %s24
      %p30 = scmp.ge.s32.totalorder %s29, 1
      %s31 = scalar_select %p30, 0, %s29
      %s32 = sadd.s32 1, %s23
      %s33 = scalar_select %p30, %s32, %s23
      %p34 = scmp.ge.s32.totalorder %s33, 2
      %s35 = scalar_select %p34, 0, %s33
      %s36 = ssub.s32 %s23, %s35
      %p37 = scmp.eq.s32.totalorder %s36, 0
      %s39 = sadd.s32 %s38, 1
      %s40 = scalar_select %p37, %s38, %s39
      %p43 = pneg %p37
      %p44 = scmp.eq.s32.totalorder %s16, 1
      %p45 = por %p43, %p44
      %p46 = scmp.ne.s32.totalorder %s38, %s41
      %p47 = scmp.eq.s32.totalorder %s16, 0
      %p48 = por %p46, %p47
      %p49 = scmp.ne.s32.totalorder %s38, %s41
      %p50 = scmp.eq.s32.totalorder %s21, 1
      %p51 = por %p49, %p50
      %p52 = scmp.ne.s32.totalorder %s41, %s42
      %p53 = scmp.eq.s32.totalorder %s21, 0
      %p54 = por %p52, %p53
      %p55 = scmp.ne.s32.totalorder %s41, %s42
      %p56 = scmp.eq.s32.totalorder %s22, 1
      %p57 = por %p55, %p56
      %p59 = scmp.ne.s32.totalorder %s42, %s58
      %p60 = scmp.eq.s32.totalorder %s22, 0
      %p61 = por %p59, %p60
      %s62 = ssub.s32 %s24, %s31
      %p63 = scmp.eq.s32.totalorder %s62, 0
      %s65 = sadd.s32 %s64, 1
      %s66 = scalar_select %p63, %s64, %s65
      %p69 = pneg %p63
      %p70 = scmp.eq.s32.totalorder %s16, 1
      %p71 = por %p69, %p70
      %p72 = scmp.ne.s32.totalorder %s64, %s67
      %p73 = scmp.eq.s32.totalorder %s16, 0
      %p74 = por %p72, %p73
      %p75 = scmp.ne.s32.totalorder %s64, %s67
      %p76 = scmp.eq.s32.totalorder %s21, 1
      %p77 = por %p75, %p76
      %p78 = scmp.ne.s32.totalorder %s67, %s68
      %p79 = scmp.eq.s32.totalorder %s21, 0
      %p80 = por %p78, %p79
      %p81 = scmp.ne.s32.totalorder %s67, %s68
      %p82 = scmp.eq.s32.totalorder %s22, 1
      %p83 = por %p81, %p82
      %p85 = scmp.ne.s32.totalorder %s68, %s84
      %p86 = scmp.eq.s32.totalorder %s22, 0
      %p87 = por %p85, %p86
      %s88 = ssub.s32 %s24, %s31
      %p89 = scmp.eq.s32.totalorder %s88, 0
      %s91 = sadd.s32 %s90, 1
      %s92 = scalar_select %p89, %s90, %s91
      %p95 = pneg %p89
      %p96 = scmp.eq.s32.totalorder %s16, 1
      %p97 = por %p95, %p96
      %p98 = scmp.ne.s32.totalorder %s90, %s93
      %p99 = scmp.eq.s32.totalorder %s16, 0
      %p100 = por %p98, %p99
      %p101 = scmp.ne.s32.totalorder %s90, %s93
      %p102 = scmp.eq.s32.totalorder %s21, 1
      %p103 = por %p101, %p102
      %p104 = scmp.ne.s32.totalorder %s93, %s94
      %p105 = scmp.eq.s32.totalorder %s21, 0
      %p106 = por %p104, %p105
      %p107 = scmp.ne.s32.totalorder %s93, %s94
      %p108 = scmp.eq.s32.totalorder %s22, 1
      %p109 = por %p107, %p108
      %p111 = scmp.ne.s32.totalorder %s94, %s110
      %p112 = scmp.eq.s32.totalorder %s22, 0
      %p113 = por %p111, %p112
      %s114 = ssub.s32 %s23, %s35
      %p115 = scmp.eq.s32.totalorder %s114, 0
      %s117 = sadd.s32 %s116, 1
      %s118 = scalar_select %p115, %s116, %s117
      %p121 = pneg %p115
      %p122 = scmp.eq.s32.totalorder %s16, 1
      %p123 = por %p121, %p122
      %p124 = scmp.ne.s32.totalorder %s116, %s119
      %p125 = scmp.eq.s32.totalorder %s16, 0
      %p126 = por %p124, %p125
      %p127 = scmp.ne.s32.totalorder %s116, %s119
      %p128 = scmp.eq.s32.totalorder %s21, 1
      %p129 = por %p127, %p128
      %p130 = scmp.ne.s32.totalorder %s119, %s120
      %p131 = scmp.eq.s32.totalorder %s21, 0
      %p132 = por %p130, %p131
      %p133 = scmp.ne.s32.totalorder %s119, %s120
      %p134 = scmp.eq.s32.totalorder %s22, 1
      %p135 = por %p133, %p134
      %p137 = scmp.ne.s32.totalorder %s120, %s136
      %p138 = scmp.eq.s32.totalorder %s22, 0
      %p139 = por %p137, %p138
      %p140 = scmp.le.s32.totalorder 1, %s16
      %p141 = scmp.lt.s32.totalorder %s16, 3
      %p142 = pnand %p140, %p141
      %p143 = pneg %p142
      // Predicated region
      $region9: #{tpu_custom_call.1} parent=5 // pred_check
        _
      $region10: #{tpu_custom_call.1} parent=5 // pred_check_branch
        %145 = sbr.rel (%p142) target = $region12
      $region11: #{tpu_custom_call.1} parent=5 // pred_region
        %s146 = ssub.s32 %s16, 1
        // Predicated region
        $region13: #{tpu_custom_call.1} parent=11 // pred_check
          %p147 = pneg %p80
        $region14: #{tpu_custom_call.1} parent=11 // pred_check_branch
          %149 = sbr.rel (%p147) target = $region16
        $region15: #{tpu_custom_call.1} parent=11 // pred_region
          %s151 = ssub.s32 1024, 1024
          %152 = vsyncadd [#allocation7], %s151
          %s153 = smul.addr %s26, 64
          %s154 = scalar_lea.hbm %s1, %s153
          %s155 = sshll.u32 [#allocation6], 4
          %s156 = int_to_ptr.vmem [resolvable:$true] %s155
          %161 = dma.hbm_to_vmem [thread:$0]  %s154, 1024, %s156, [#allocation7], 64, 64, 4
        $region16: #{tpu_custom_call.1} parent=11 // pred_fallthru
          _
        // Predicated region
        $region17: #{tpu_custom_call.1} parent=11 // pred_check
          %p162 = pneg %p106
        $region18: #{tpu_custom_call.1} parent=11 // pred_check_branch
          %164 = sbr.rel (%p162) target = $region20
        $region19: #{tpu_custom_call.1} parent=11 // pred_region
          %s165 = smul.u32 16, %s26
          %s167 = ssub.s32 1024, 1024
          %168 = vsyncadd [#allocation7], %s167
          %s169 = smul.addr %s165, 64
          %s170 = scalar_lea.hbm %s2, %s169
          %s171 = sshll.u32 [#allocation8], 4
          %s172 = int_to_ptr.vmem [resolvable:$true] %s171
          %177 = dma.hbm_to_vmem [thread:$0]  %s170, 1024, %s172, [#allocation7], 64, 64, 4
        $region20: #{tpu_custom_call.1} parent=11 // pred_fallthru
          _
      $region12: #{tpu_custom_call.1} parent=5 // pred_fallthru
        _
      %p178 = scmp.lt.s32.totalorder %s16, 2
      // Predicated region
      $region21: #{tpu_custom_call.1} parent=5 // pred_check
        %p179 = pneg %p178
      $region22: #{tpu_custom_call.1} parent=5 // pred_check_branch
        %181 = sbr.rel (%p179) target = $region24
      $region23: #{tpu_custom_call.1} parent=5 // pred_region
        // Predicated region
        $region25: #{tpu_custom_call.1} parent=23 // pred_check
          %p182 = pneg %p48
        $region26: #{tpu_custom_call.1} parent=23 // pred_check_branch
          %184 = sbr.rel (%p182) target = $region28
        $region27: #{tpu_custom_call.1} parent=23 // pred_region
          %s185 = sand.u32 %s38, 1
          %s186 = scalar_lea.sflag [#allocation4], %s185
          %s187 = sand.u32 %s38, 1
          %s188 = smul.addr %s187, 4
          %s189 = scalar_lea.vmem [#allocation3], %s188
          %s191 = ssub.s32 64, 64
          %192 = vsyncadd %s186, %s191
          %s193 = smul.addr %s23, 64
          %s194 = scalar_lea.hbm %s0, %s193
          %s196 = sshll.u32 %s189, 4
          %s197 = int_to_ptr.vmem [resolvable:$true] %s196
          %199 = dma.hbm_to_vmem [thread:$0]  %s194, 64, %s197, %s186
        $region28: #{tpu_custom_call.1} parent=23 // pred_fallthru
          _
      $region24: #{tpu_custom_call.1} parent=5 // pred_fallthru
        _
      %p200 = scmp.le.s32.totalorder 1, %s16
      %p201 = scmp.lt.s32.totalorder %s16, 3
      %p202 = pnand %p200, %p201
      %p203 = pneg %p202
      // Predicated region
      $region29: #{tpu_custom_call.1} parent=5 // pred_check
        _
      $region30: #{tpu_custom_call.1} parent=5 // pred_check_branch
        %205 = sbr.rel (%p202) target = $region32
      $region31: #{tpu_custom_call.1} parent=5 // pred_region
        %s206 = ssub.s32 %s16, 1
        %s207 = sand.u32 %s41, 1
        %s208 = scalar_lea.sflag [#allocation4], %s207
        %s209 = sand.u32 %s41, 1
        %s210 = smul.addr %s209, 4
        %s211 = scalar_lea.vmem [#allocation3], %s210
        // Predicated region
        $region33: #{tpu_custom_call.1} parent=31 // pred_check
          %p212 = pneg %p54
        $region34: #{tpu_custom_call.1} parent=31 // pred_check_branch
          %214 = sbr.rel (%p212) target = $region36
        $region35: #{tpu_custom_call.1} parent=31 // pred_region
          %215 = dma.done %s208, 64
        $region36: #{tpu_custom_call.1} parent=31 // pred_fallthru
          _
        // Predicated region
        $region37: #{tpu_custom_call.1} parent=31 // pred_check
          %p216 = pneg %p80
        $region38: #{tpu_custom_call.1} parent=31 // pred_check_branch
          %218 = sbr.rel (%p216) target = $region40
        $region39: #{tpu_custom_call.1} parent=31 // pred_region
          %219 = dma.done [#allocation7], 1024
        $region40: #{tpu_custom_call.1} parent=31 // pred_fallthru
          _
        // Predicated region
        $region41: #{tpu_custom_call.1} parent=31 // pred_check
          %p220 = pneg %p106
        $region42: #{tpu_custom_call.1} parent=31 // pred_check_branch
          %222 = sbr.rel (%p220) target = $region44
        $region43: #{tpu_custom_call.1} parent=31 // pred_region
          %223 = dma.done [#allocation7], 1024
        $region44: #{tpu_custom_call.1} parent=31 // pred_fallthru
          _
        %s224 = sand.u32 %s41, 1
        %s225 = scalar_lea.sflag [#allocation4], %s224
        %s226 = sand.u32 %s41, 1
        %s227 = smul.addr %s226, 4
        %s228 = scalar_lea.vmem [#allocation3], %s227
        %p229 = pneg %p54
        %p230 = pneg %p51
        %p231 = pneg %p80
        %p232 = pneg %p77
        %p233 = pneg %p106
        %p234 = pneg %p103
        %p235 = pneg %p132
        %p236 = pneg %p129
        %s237 = sand.u32 %s119, 1
        %s238 = scalar_lea.sflag [#allocation5], %s237
        %s239 = sand.u32 %s119, 1
        %s240 = smul.addr %s239, 4
        %s241 = scalar_lea.vmem [#allocation9], %s240
        %s242 = smul.u32 16, %s26
        %p244 = scmp.eq.s32.totalorder %s26, 0
        // Predicated region
        $region45: #{tpu_custom_call.1} parent=31 // pred_check
          %p245 = pneg %p244
        $region46: #{tpu_custom_call.1} parent=31 // pred_check_branch
          %247 = sbr.rel (%p245) target = $region48
        $region47: #{tpu_custom_call.1} parent=31 // pred_region
          %248 = vst [vmem:[#allocation2] sm:$0xff] 0.0
        $region48: #{tpu_custom_call.1} parent=31 // pred_fallthru
          _
        %v249 = vld [vmem:[%s211] sm:$0xf]
        %v250 = vld [vmem:[#allocation6] sm:$0xf]
        %v251 = vld [vmem:[#allocation6 + $0x4] sm:$0xf]
        %v252 = vld [vmem:[#allocation6 + $0x8] sm:$0xf]
        %v253 = vld [vmem:[#allocation6 + $0xc] sm:$0xf]
        %v254 = vld [vmem:[#allocation6 + $0x10] sm:$0xf]
        %v255 = vld [vmem:[#allocation6 + $0x14] sm:$0xf]
        %v256 = vld [vmem:[#allocation6 + $0x18] sm:$0xf]
        %v257 = vld [vmem:[#allocation6 + $0x1c] sm:$0xf]
        %v258 = vld [vmem:[#allocation6 + $0x20] sm:$0xf]
        %v259 = vld [vmem:[#allocation6 + $0x24] sm:$0xf]
        %v260 = vld [vmem:[#allocation6 + $0x28] sm:$0xf]
        %v261 = vld [vmem:[#allocation6 + $0x2c] sm:$0xf]
        %v262 = vld [vmem:[#allocation6 + $0x30] sm:$0xf]
        %v263 = vld [vmem:[#allocation6 + $0x34] sm:$0xf]
        %v264 = vld [vmem:[#allocation6 + $0x38] sm:$0xf]
        %v265 = vld [vmem:[#allocation6 + $0x3c] sm:$0xf]
        %v282 = vunpack.c.l.b16 %v250
        %v283 = vunpack.c.l.b16 %v251
        %v284 = vunpack.c.l.b16 %v252
        %v285 = vunpack.c.l.b16 %v253
        %v286 = vunpack.c.l.b16 %v254
        %v287 = vunpack.c.l.b16 %v255
        %v288 = vunpack.c.l.b16 %v256
        %v289 = vunpack.c.l.b16 %v257
        %v290 = vunpack.c.l.b16 %v258
        %v291 = vunpack.c.l.b16 %v259
        %v292 = vunpack.c.l.b16 %v260
        %v293 = vunpack.c.l.b16 %v261
        %v294 = vunpack.c.l.b16 %v262
        %v295 = vunpack.c.l.b16 %v263
        %v296 = vunpack.c.l.b16 %v264
        %v297 = vunpack.c.l.b16 %v265
        %v298 = vpack.c.b16 %v283, %v282
        %v299 = vpack.c.b16 %v285, %v284
        %v300 = vpack.c.b16 %v287, %v286
        %v301 = vpack.c.b16 %v289, %v288
        %v302 = vpack.c.b16 %v291, %v290
        %v303 = vpack.c.b16 %v293, %v292
        %v304 = vpack.c.b16 %v295, %v294
        %v305 = vpack.c.b16 %v297, %v296
        %314 = vmatprep.subr.bf16.mxu0 0
        %315 = vmatpush1.bf16.msra.mxu0 %v298
        %316 = vmatprep.subr.bf16.mxu0 0
        %317 = vmatpush1.bf16.msra.mxu0 %v299
        %318 = vmatprep.subr.bf16.mxu0 0
        %319 = vmatpush1.bf16.msra.mxu0 %v300
        %320 = vmatprep.subr.bf16.mxu0 0
        %321 = vmatpush1.bf16.msra.mxu0 %v301
        %322 = vmatprep.subr.bf16.mxu0 0
        %323 = vmatpush1.bf16.msra.mxu0 %v302
        %324 = vmatprep.subr.bf16.mxu0 0
        %325 = vmatpush1.bf16.msra.mxu0 %v303
        %326 = vmatprep.subr.bf16.mxu0 0
        %327 = vmatpush1.bf16.msra.mxu0 %v304
        %328 = vmatprep.subr.bf16.mxu0 0
        %329 = vmatpush1.bf16.msra.mxu0 %v305
        %330 = vmatprep.subr.bf16.mxu0 0
        %331 = vmatpush1.bf16.msra.mxu0 0
        %332 = vmatprep.subr.bf16.mxu0 0
        %333 = vmatpush1.bf16.msra.mxu0 0
        %334 = vmatprep.subr.bf16.mxu0 0
        %335 = vmatpush1.bf16.msra.mxu0 0
        %336 = vmatprep.subr.bf16.mxu0 0
        %337 = vmatpush1.bf16.msra.mxu0 0
        %338 = vmatprep.subr.bf16.mxu0 0
        %339 = vmatpush1.bf16.msra.mxu0 0
        %340 = vmatprep.subr.bf16.mxu0 0
        %341 = vmatpush1.bf16.msra.mxu0 0
        %342 = vmatprep.subr.bf16.mxu0 0
        %343 = vmatpush1.bf16.msra.mxu0 0
        %344 = vmatprep.subr.bf16.mxu0 0
        %345 = vmatpush1.bf16.msra.mxu0 0
        %346 = vmatprep.mubr.bf16.mxu0 0
        %347 = vmatmul.mubr.bf16.gmra.mrb[0].mxu0 %v249
        %v348 = vpop.f32.mrb[0].mxu0
        %v349 = vadd.f32 0.0, %v348
        %v350 = vpop.f32.mrb[0].mxu0
        %v351 = vpop.f32.mrb[0].mxu0
        %v352 = vpop.f32.mrb[0].mxu0
        %353 = vdwg.mxu0
        %v354 = vmax.f32 %v349, 0.0
        %v355 = vmul.f32 %v354, %v354
        %v356 = vpack.c.bf16 %v355, %v355
        %v357 = vld [vmem:[#allocation2] sm:$0xff]
        %v358 = vld [vmem:[#allocation8] sm:$0xf]
        %v359 = vld [vmem:[#allocation8 + $0x4] sm:$0xf]
        %v360 = vld [vmem:[#allocation8 + $0x8] sm:$0xf]
        %v361 = vld [vmem:[#allocation8 + $0xc] sm:$0xf]
        %v362 = vld [vmem:[#allocation8 + $0x10] sm:$0xf]
        %v363 = vld [vmem:[#allocation8 + $0x14] sm:$0xf]
        %v364 = vld [vmem:[#allocation8 + $0x18] sm:$0xf]
        %v365 = vld [vmem:[#allocation8 + $0x1c] sm:$0xf]
        %v366 = vld [vmem:[#allocation8 + $0x20] sm:$0xf]
        %v367 = vld [vmem:[#allocation8 + $0x24] sm:$0xf]
        %v368 = vld [vmem:[#allocation8 + $0x28] sm:$0xf]
        %v369 = vld [vmem:[#allocation8 + $0x2c] sm:$0xf]
        %v370 = vld [vmem:[#allocation8 + $0x30] sm:$0xf]
        %v371 = vld [vmem:[#allocation8 + $0x34] sm:$0xf]
        %v372 = vld [vmem:[#allocation8 + $0x38] sm:$0xf]
        %v373 = vld [vmem:[#allocation8 + $0x3c] sm:$0xf]
        %v390 = vunpack.c.l.b16 %v358
        %v391 = vunpack.c.l.b16 %v359
        %v392 = vunpack.c.l.b16 %v360
        %v393 = vunpack.c.l.b16 %v361
        %v394 = vunpack.c.l.b16 %v362
        %v395 = vunpack.c.l.b16 %v363
        %v396 = vunpack.c.l.b16 %v364
        %v397 = vunpack.c.l.b16 %v365
        %v398 = vunpack.c.l.b16 %v366
        %v399 = vunpack.c.l.b16 %v367
        %v400 = vunpack.c.l.b16 %v368
        %v401 = vunpack.c.l.b16 %v369
        %v402 = vunpack.c.l.b16 %v370
        %v403 = vunpack.c.l.b16 %v371
        %v404 = vunpack.c.l.b16 %v372
        %v405 = vunpack.c.l.b16 %v373
        %v406 = vpack.c.b16 %v391, %v390
        %v407 = vpack.c.b16 %v393, %v392
        %v408 = vpack.c.b16 %v395, %v394
        %v409 = vpack.c.b16 %v397, %v396
        %v410 = vpack.c.b16 %v399, %v398
        %v411 = vpack.c.b16 %v401, %v400
        %v412 = vpack.c.b16 %v403, %v402
        %v413 = vpack.c.b16 %v405, %v404
        %422 = vmatprep.subr.bf16.mxu0 0
        %423 = vmatpush1.bf16.msra.mxu0 %v406
        %424 = vmatprep.subr.bf16.mxu0 0
        %425 = vmatpush1.bf16.msra.mxu0 %v407
        %426 = vmatprep.subr.bf16.mxu0 0
        %427 = vmatpush1.bf16.msra.mxu0 %v408
        %428 = vmatprep.subr.bf16.mxu0 0
        %429 = vmatpush1.bf16.msra.mxu0 %v409
        %430 = vmatprep.subr.bf16.mxu0 0
        %431 = vmatpush1.bf16.msra.mxu0 %v410
        %432 = vmatprep.subr.bf16.mxu0 0
        %433 = vmatpush1.bf16.msra.mxu0 %v411
        %434 = vmatprep.subr.bf16.mxu0 0
        %435 = vmatpush1.bf16.msra.mxu0 %v412
        %436 = vmatprep.subr.bf16.mxu0 0
        %437 = vmatpush1.bf16.msra.mxu0 %v413
        %438 = vmatprep.subr.bf16.mxu0 0
        %439 = vmatpush1.bf16.msra.mxu0 0
        %440 = vmatprep.subr.bf16.mxu0 0
        %441 = vmatpush1.bf16.msra.mxu0 0
        %442 = vmatprep.subr.bf16.mxu0 0
        %443 = vmatpush1.bf16.msra.mxu0 0
        %444 = vmatprep.subr.bf16.mxu0 0
        %445 = vmatpush1.bf16.msra.mxu0 0
        %446 = vmatprep.subr.bf16.mxu0 0
        %447 = vmatpush1.bf16.msra.mxu0 0
        %448 = vmatprep.subr.bf16.mxu0 0
        %449 = vmatpush1.bf16.msra.mxu0 0
        %450 = vmatprep.subr.bf16.mxu0 0
        %451 = vmatpush1.bf16.msra.mxu0 0
        %452 = vmatprep.subr.bf16.mxu0 0
        %453 = vmatpush1.bf16.msra.mxu0 0
        %454 = vmatprep.mubr.bf16.mxu0 0
        %455 = vmatmul.mubr.bf16.gmra.mrb[0].mxu0 %v356
        %v456 = vpop.f32.mrb[0].mxu0
        %v457 = vadd.f32 0.0, %v456
        %v458 = vpop.f32.mrb[0].mxu0
        %v459 = vpop.f32.mrb[0].mxu0
        %v460 = vpop.f32.mrb[0].mxu0
        %461 = vdwg.mxu0
        %v462 = vadd.f32 %v357, %v457
        %463 = vst [vmem:[#allocation2] sm:$0xff] %v462
        // Predicated region
        $region49: #{tpu_custom_call.1} parent=31 // pred_check
          %p464 = pneg %p244
        $region50: #{tpu_custom_call.1} parent=31 // pred_check_branch
          %466 = sbr.rel (%p464) target = $region52
        $region51: #{tpu_custom_call.1} parent=31 // pred_region
          %v467 = vld [vmem:[#allocation2] sm:$0xff]
          %v468 = vpack.c.bf16 %v467, %v467
          %469 = vst [vmem:[%s241] sm:$0xf] %v468
        $region52: #{tpu_custom_call.1} parent=31 // pred_fallthru
          _
        %s470 = sand.u32 %s119, 1
        %s471 = scalar_lea.sflag [#allocation5], %s470
        %s472 = sand.u32 %s119, 1
        %s473 = smul.addr %s472, 4
        %s474 = scalar_lea.vmem [#allocation9], %s473
        // Predicated region
        $region53: #{tpu_custom_call.1} parent=31 // pred_check
          %p475 = pneg %p129
        $region54: #{tpu_custom_call.1} parent=31 // pred_check_branch
          %477 = sbr.rel (%p475) target = $region56
        $region55: #{tpu_custom_call.1} parent=31 // pred_region
          %s479 = ssub.s32 64, 64
          %480 = vsyncadd %s471, %s479
          %s481 = smul.addr %s25, 64
          %s482 = scalar_lea.hbm %s3, %s481
          %s484 = sshll.u32 %s474, 4
          %s485 = int_to_ptr.vmem [resolvable:$true] %s484
          %487 = dma.vmem_to_hbm [thread:$0]  %s485, 64, %s482, %s471
        $region56: #{tpu_custom_call.1} parent=31 // pred_fallthru
          _
      $region32: #{tpu_custom_call.1} parent=5 // pred_fallthru
        _
      %p488 = scmp.le.s32.totalorder 2, %s16
      // Predicated region
      $region57: #{tpu_custom_call.1} parent=5 // pred_check
        %p489 = pneg %p488
      $region58: #{tpu_custom_call.1} parent=5 // pred_check_branch
        %491 = sbr.rel (%p489) target = $region60
      $region59: #{tpu_custom_call.1} parent=5 // pred_region
        %s492 = ssub.s32 %s16, 2
        // Predicated region
        $region61: #{tpu_custom_call.1} parent=59 // pred_check
          %p493 = pneg %p135
        $region62: #{tpu_custom_call.1} parent=59 // pred_check_branch
          %495 = sbr.rel (%p493) target = $region64
        $region63: #{tpu_custom_call.1} parent=59 // pred_region
          %s496 = sand.u32 %s120, 1
          %s497 = scalar_lea.sflag [#allocation5], %s496
          %s498 = sand.u32 %s120, 1
          %s499 = smul.addr %s498, 4
          %s500 = scalar_lea.vmem [#allocation9], %s499
          %501 = dma.done %s497, 64
        $region64: #{tpu_custom_call.1} parent=59 // pred_fallthru
          _
      $region60: #{tpu_custom_call.1} parent=5 // pred_fallthru
        _
    $region6: #{tpu_custom_call.1} parent=1 // loop_footer
      %s20 = sadd.s32 1, %s16
    $region7: #{tpu_custom_call.1} parent=1 // loop_footer_branch
      %15 = sbr.rel target = $region3
    $region8: #{tpu_custom_call.1} parent=1 // loop_exit
      _
    %502 = vsyncpa [#allocation4], 1
    %s503 = scalar_lea.sflag [#allocation4], 1
    %504 = vsyncpa %s503, 1
    %505 = vsyncpa [#allocation7], 1
    %506 = vsyncpa [#allocation5], 1
    %s507 = scalar_lea.sflag [#allocation5], 1
    %508 = vsyncpa %s507, 1

</llo_original>
